<compile_context>
chip_gen: v5e
topology: v5e:2x2
jax: 0.10.0
libtpu: 0.0.40
codegen_flags: <defaults>
</compile_context>

<pallas_src>
import functools

import jax
import jax.numpy as jnp
from jax.experimental import pallas as pl
from jax.experimental.pallas import tpu as pltpu


# ----------------------------------------------------------------------------
# Fused kernel: grid = (2, N, spb); sweep p=0 conv + stats -> VMEM scratch,
#               sweep p=1 BN + ReLU from scratch -> NCHW-compatible output.
# ----------------------------------------------------------------------------
def _fused_kernel(p_ref, w_ref, gamma_ref, beta_ref, o_ref,
                  conv_sc, sum_sc, sq_sc, scale_sc, shift_sc,
                  *, spb, m_total, eps):
    p = pl.program_id(0)
    n = pl.program_id(1)
    s = pl.program_id(2)
    blk = n * spb + s
    is_first = (n == 0) & (s == 0)

    @pl.when(p == 0)
    def _conv_and_stats():
        @pl.when(is_first)
        def _init():
            sum_sc[...] = jnp.zeros_like(sum_sc)
            sq_sc[...] = jnp.zeros_like(sq_sc)

        # bf16 x bf16 on the MXU, f32 accumulation; lane-dense (Cout, tm).
        y = jnp.dot(w_ref[...], p_ref[...], preferred_element_type=jnp.float32)
        conv_sc[blk] = y                                       # f32, stays in VMEM
        sum_sc[...] += jnp.sum(y, axis=1, keepdims=True)       # (Cout, 1)
        sq_sc[...] += jnp.sum(y * y, axis=1, keepdims=True)    # (Cout, 1)

    @pl.when(p == 1)
    def _bn_relu():
        @pl.when(is_first)
        def _finalize_stats():
            count = jnp.float32(m_total)
            mean = sum_sc[...] / count
            var = jnp.maximum(sq_sc[...] / count - mean * mean, 0.0)
            scale = gamma_ref[...] * jax.lax.rsqrt(var + eps)
            scale_sc[...] = scale
            shift_sc[...] = beta_ref[...] - mean * scale

        y = conv_sc[blk]                                       # (Cout, tm) f32
        o_ref[...] = jnp.maximum(y * scale_sc[...] + shift_sc[...],
                                 0.0).astype(o_ref.dtype)


# ----------------------------------------------------------------------------
# Two-pass kernels (fallback when the conv intermediate does not fit VMEM).
# ----------------------------------------------------------------------------
def _conv_stats_kernel(p_ref, w_ref, conv_ref, sum_ref, sq_ref):
    y = jnp.dot(w_ref[...], p_ref[...], preferred_element_type=jnp.float32)  # (Cout, tm)
    conv_ref[...] = y.astype(conv_ref.dtype)                   # bf16 intermediate
    # Per-block partial stats -> no carried state -> fully "parallel" grid.
    sum_ref[...] = jnp.sum(y, axis=1, keepdims=True)
    sq_ref[...] = jnp.sum(y * y, axis=1, keepdims=True)


def _bn_relu_kernel(y_ref, scale_ref, shift_ref, o_ref):
    y = y_ref[...].astype(jnp.float32)                         # (Cout, tm)
    o_ref[...] = jnp.maximum(y * scale_ref[...] + shift_ref[...],
                             0.0).astype(o_ref.dtype)


# ----------------------------------------------------------------------------
# Tile picker: tm must divide OH*OW (so blocks never straddle images and the
# output is NCHW-compatible).  Candidates are 128-multiples dividing OH*OW
# plus OH*OW itself (full-dim blocks are always layout-legal).  Pick the
# largest fitting the doubled (double-buffered) VMEM budget; prefer >= 2 total
# blocks so a "parallel" grid shards across both v7x TensorCores.
# ----------------------------------------------------------------------------
def _pick_tile_m(ohw, n_imgs, bytes_per_lane, budget_bytes, tm_cap=4096):
    cands = [t for t in range(128, min(ohw, tm_cap) + 1, 128) if ohw % t == 0]
    if not cands:
        cands = [ohw]
    fitting = [t for t in cands if 2 * t * bytes_per_lane <= budget_bytes]
    pool = fitting if fitting else cands[:1]
    tm = max(pool)
    if n_imgs * (ohw // tm) < 2:                # v7x: keep both TCs busy if possible
        multi = [t for t in pool if n_imgs * (ohw // t) >= 2]
        if multi:
            tm = max(multi)
    return tm


# ----------------------------------------------------------------------------
# Wrapper (module boundary stays PyTorch-style NCHW / f32)
# ----------------------------------------------------------------------------
def conv_bn_relu(x, weight, bias, gamma, beta, *, stride=1, padding=1,
                 eps=1e-5, tm=None, mode="auto", out_dtype=jnp.float32):
    """x: (N, Cin, H, W) f32; weight: (Cout, Cin, KH, KW); bias/gamma/beta: (Cout,)."""
    del bias  # exactly cancelled by training-mode BN mean subtraction (see header)
    if mode not in ("auto", "fused", "two_pass"):
        raise ValueError(f"unknown mode {mode!r}")

    N, Cin, H, W = x.shape
    Cout, _, KH, KW = weight.shape
    OH = (H + 2 * padding - KH) // stride + 1
    OW = (W + 2 * padding - KW) // stride + 1
    OHW = OH * OW
    M = N * OHW
    K = Cin * KH * KW

    # -------- im2col in bf16 (cast BEFORE pad/stack/transpose) ---------------
    # K ordering matches weight.reshape(Cout, Cin*KH*KW): k = cin*KH*KW + kh*KW + kw
    # spatial ordering: s = oh*OW + ow  -> (N, Cout, OHW) reshapes to NCHW for free.
    xb = x.astype(jnp.bfloat16)
    xp = jnp.pad(xb, ((0, 0), (0, 0), (padding, padding), (padding, padding)))
    taps = [xp[:, :, kh:kh + stride * OH:stride, kw:kw + stride * OW:stride]
            for kh in range(KH) for kw in range(KW)]            # each (N, Cin, OH, OW)
    pat = jnp.stack(taps, axis=0)                               # (KH*KW, N, Cin, OH, OW)
    patches = pat.transpose(1, 2, 0, 3, 4).reshape(N, K, OHW)   # (N, K, OHW) bf16
    w2d = weight.reshape(Cout, K).astype(jnp.bfloat16)          # (Cout, K) bf16
    gamma2 = gamma.astype(jnp.float32).reshape(Cout, 1)
    beta2 = beta.astype(jnp.float32).reshape(Cout, 1)

    if tm is not None:
        assert OHW % tm == 0 and (tm % 128 == 0 or tm == OHW), \
            "tm must divide OH*OW and be a multiple of 128 (or equal OH*OW)"

    use_fused = (mode == "fused") or (mode == "auto" and Cout * M * 4 <= (4 << 20))

    # ======================= fused single-call path ==========================
    if use_fused:
        bpl = 2 * K + 4 * Cout                                  # bf16 patches in + f32 out per column
        tm1 = tm if tm is not None else _pick_tile_m(OHW, N, bpl, 8 << 20)
        spb = OHW // tm1
        kernel = functools.partial(_fused_kernel, spb=spb, m_total=M, eps=eps)

        y = pl.pallas_call(
            kernel,
            out_shape=jax.ShapeDtypeStruct((N, Cout, OHW), out_dtype),
            grid_spec=pltpu.PrefetchScalarGridSpec(
                num_scalar_prefetch=0,
                grid=(2, N, spb),                               # sweep axis outermost
                in_specs=[
                    # park patch blocks at (0,0,0) during the BN sweep (p=1): no re-DMA
                    pl.BlockSpec((None, K, tm1),
                                 lambda p, n, s: (n * (1 - p), 0, s * (1 - p))),
                    pl.BlockSpec((Cout, K), lambda p, n, s: (0, 0)),   # resident weights
                    pl.BlockSpec((Cout, 1), lambda p, n, s: (0, 0)),   # gamma
                    pl.BlockSpec((Cout, 1), lambda p, n, s: (0, 0)),   # beta
                ],
                # park output at block (0,0,0) during the conv sweep (p=0): the only
                # HBM write-back per block carries the final BN+ReLU values.
                out_specs=pl.BlockSpec((None, Cout, tm1),
                                       lambda p, n, s: (n * p, 0, s * p)),
                scratch_shapes=[
                    pltpu.VMEM((N * spb, Cout, tm1), jnp.float32),  # full f32 conv intermediate
                    pltpu.VMEM((Cout, 1), jnp.float32),             # sum
                    pltpu.VMEM((Cout, 1), jnp.float32),             # sum of squares
                    pltpu.VMEM((Cout, 1), jnp.float32),             # BN scale
                    pltpu.VMEM((Cout, 1), jnp.float32),             # BN shift
                ],
            ),
            compiler_params=pltpu.CompilerParams(
                # carried VMEM state (stats + intermediate) -> must stay on one core
                dimension_semantics=("arbitrary", "arbitrary", "arbitrary")),
        )(patches, w2d, gamma2, beta2)
        return y.reshape(N, Cout, OH, OW)                       # free metadata reshape

    # ========================== two-pass path =================================
    # Pass 1: conv matmul + per-block per-channel partial stats.
    bpl1 = 2 * K + 2 * Cout                                     # bf16 patches in + bf16 conv out
    tm1 = tm if tm is not None else _pick_tile_m(OHW, N, bpl1, 10 << 20)
    spb1 = OHW // tm1
    conv_bf16, psum, psq = pl.pallas_call(
        _conv_stats_kernel,
        out_shape=(
            jax.ShapeDtypeStruct((N, Cout, OHW), jnp.bfloat16),
            jax.ShapeDtypeStruct((N, spb1, Cout, 1), jnp.float32),
            jax.ShapeDtypeStruct((N, spb1, Cout, 1), jnp.float32),
        ),
        grid_spec=pltpu.PrefetchScalarGridSpec(
            num_scalar_prefetch=0,
            grid=(N, spb1),
            in_specs=[
                pl.BlockSpec((None, K, tm1), lambda n, s: (n, 0, s)),
                pl.BlockSpec((Cout, K), lambda n, s: (0, 0)),   # resident weights
            ],
            out_specs=[
                pl.BlockSpec((None, Cout, tm1), lambda n, s: (n, 0, s)),
                pl.BlockSpec((None, None, Cout, 1), lambda n, s: (n, s, 0, 0)),
                pl.BlockSpec((None, None, Cout, 1), lambda n, s: (n, s, 0, 0)),
            ],
        ),
        compiler_params=pltpu.CompilerParams(
            dimension_semantics=("parallel", "parallel")),      # no carried state
    )(patches, w2d)

    # BN scalar math (tiny per-channel glue, f32).
    count = jnp.float32(M)
    mean = jnp.sum(psum, axis=(0, 1)) / count                   # (Cout, 1)
    var = jnp.maximum(jnp.sum(psq, axis=(0, 1)) / count - mean * mean, 0.0)
    scale = gamma2 * jax.lax.rsqrt(var + eps)
    shift = beta2 - mean * scale

    # Pass 2: fused BN + ReLU, budgeted independently (cheaper per column).
    bpl2 = (2 + 4) * Cout                                       # bf16 in + (<=f32) out per column
    tm2 = tm if tm is not None else _pick_tile_m(OHW, N, bpl2, 10 << 20)
    spb2 = OHW // tm2
    y = pl.pallas_call(
        _bn_relu_kernel,
        out_shape=jax.ShapeDtypeStruct((N, Cout, OHW), out_dtype),
        grid_spec=pltpu.PrefetchScalarGridSpec(
            num_scalar_prefetch=0,
            grid=(N, spb2),
            in_specs=[
                pl.BlockSpec((None, Cout, tm2), lambda n, s: (n, 0, s)),
                pl.BlockSpec((Cout, 1), lambda n, s: (0, 0)),
                pl.BlockSpec((Cout, 1), lambda n, s: (0, 0)),
            ],
            out_specs=pl.BlockSpec((None, Cout, tm2), lambda n, s: (n, 0, s)),
        ),
        compiler_params=pltpu.CompilerParams(
            dimension_semantics=("parallel", "parallel")),
    )(conv_bf16, scale, shift)
    return y.reshape(N, Cout, OH, OW)                           # free metadata reshape


# ----------------------------------------------------------------------------
# Pure-JAX f32 reference (Conv2d with bias + training-mode BN + ReLU)
# ----------------------------------------------------------------------------
def conv_bn_relu_ref(x, weight, bias, gamma, beta, *, stride=1, padding=1, eps=1e-5):
    conv = jax.lax.conv_general_dilated(
        x, weight, (stride, stride), ((padding, padding), (padding, padding)),
        dimension_numbers=("NCHW", "OIHW", "NCHW"))
    conv = conv + bias.reshape(1, -1, 1, 1)
    mean = conv.mean(axis=(0, 2, 3))
    var = conv.var(axis=(0, 2, 3))
    norm = (conv - mean[None, :, None, None]) / jnp.sqrt(var + eps)[None, :, None, None]
    return jnp.maximum(norm * gamma[None, :, None, None] + beta[None, :, None, None], 0.0)


if __name__ == "__main__":
    # Small shapes consistent with the module: Conv2d(4, 8, kernel=3, stride=1, pad=1)
    N, Cin, H, W = 2, 4, 16, 16
    Cout, KH, KW = 8, 3, 3

    key = jax.random.PRNGKey(0)
    kx, kwt, kb, kg, kbeta = jax.random.split(key, 5)
    x = jax.random.normal(kx, (N, Cin, H, W), dtype=jnp.float32)
    weight = 0.1 * jax.random.normal(kwt, (Cout, Cin, KH, KW), dtype=jnp.float32)
    bias = 0.1 * jax.random.normal(kb, (Cout,), dtype=jnp.float32)
    gamma = 1.0 + 0.1 * jax.random.normal(kg, (Cout,), dtype=jnp.float32)
    beta = 0.1 * jax.random.normal(kbeta, (Cout,), dtype=jnp.float32)

    ref = conv_bn_relu_ref(x, weight, bias, gamma, beta, stride=1, padding=1)

    # Path 1: auto -> fused single pallas_call (intermediate lives in VMEM scratch).
    fn_fused = jax.jit(functools.partial(conv_bn_relu, stride=1, padding=1))
    out_fused = jax.block_until_ready(fn_fused(x, weight, bias, gamma, beta))
    assert out_fused.shape == (N, Cout, H, W), out_fused.shape
    err = float(jnp.max(jnp.abs(out_fused - ref)))
    assert jnp.allclose(out_fused, ref, atol=5e-2, rtol=5e-2), err

    # Path 2: explicit two-pass pipeline with a multi-block grid (tm=128 -> 4 blocks),
    # exercising the partial-stats reduction and both "parallel" grids.
    fn_two = jax.jit(functools.partial(conv_bn_relu, stride=1, padding=1,
                                       mode="two_pass", tm=128))
    out_two = jax.block_until_ready(fn_two(x, weight, bias, gamma, beta))
    err2 = float(jnp.max(jnp.abs(out_two - ref)))
    assert jnp.allclose(out_two, ref, atol=5e-2, rtol=5e-2), err2

    print("KERNEL_OK")
</pallas_src>

<mosaic_0001>
module attributes {stable_mosaic.version = 11 : i64} {
  func.func @_fused_kernel(%arg0: i32, %arg1: i32, %arg2: i32, %arg3: memref<1x36x256xbf16, #tpu.memory_space<vmem>>, %arg4: memref<8x36xbf16, #tpu.memory_space<vmem>>, %arg5: memref<8x1xf32, #tpu.memory_space<vmem>>, %arg6: memref<8x1xf32, #tpu.memory_space<vmem>>, %arg7: memref<1x8x256xf32, #tpu.memory_space<vmem>>, %arg8: memref<2x8x256xf32, #tpu.memory_space<vmem>>, %arg9: memref<8x1xf32, #tpu.memory_space<vmem>>, %arg10: memref<8x1xf32, #tpu.memory_space<vmem>>, %arg11: memref<8x1xf32, #tpu.memory_space<vmem>>, %arg12: memref<8x1xf32, #tpu.memory_space<vmem>>) attributes {dimension_semantics = [#tpu.dimension_semantics<arbitrary>, #tpu.dimension_semantics<arbitrary>, #tpu.dimension_semantics<arbitrary>], iteration_bounds = array<i64: 2, 2, 1>, scalar_prefetch = 0 : i64, scratch_operands = 5 : i64, tpu.core_type = #tpu.core_type<tc>, window_params = [{transform_indices = @transform_0, window_bounds = array<i64: 1, 36, 256>}, {pipeline_mode = #tpu.pipeline_mode<synchronous>, transform_indices = @transform_1, window_bounds = array<i64: 8, 36>}, {pipeline_mode = #tpu.pipeline_mode<synchronous>, transform_indices = @transform_2, window_bounds = array<i64: 8, 1>}, {pipeline_mode = #tpu.pipeline_mode<synchronous>, transform_indices = @transform_3, window_bounds = array<i64: 8, 1>}, {transform_indices = @transform_4, window_bounds = array<i64: 1, 8, 256>}]} {
    %c1_i32 = arith.constant 1 : i32
    %0 = arith.muli %arg1, %c1_i32 : i32
    %1 = arith.addi %0, %arg2 : i32
    %c0_i32 = arith.constant 0 : i32
    %2 = arith.cmpi eq, %arg1, %c0_i32 : i32
    %c0_i32_0 = arith.constant 0 : i32
    %3 = arith.cmpi eq, %arg2, %c0_i32_0 : i32
    %4 = arith.andi %2, %3 : i1
    %c0_i32_1 = arith.constant 0 : i32
    %5 = arith.cmpi eq, %arg0, %c0_i32_1 : i32
    %6 = arith.extui %5 : i1 to i32
    %c0_i32_2 = arith.constant 0 : i32
    %7 = arith.cmpi ne, %6, %c0_i32_2 : i32
    scf.if %7 {
      %11 = arith.extui %4 : i1 to i32
      %c0_i32_5 = arith.constant 0 : i32
      %12 = arith.cmpi ne, %11, %c0_i32_5 : i32
      scf.if %12 {
        %cst_22 = arith.constant 0.000000e+00 : f32
        %32 = vector.broadcast %cst_22 : f32 to vector<8x1xf32>
        %c0_23 = arith.constant 0 : index
        %c0_24 = arith.constant 0 : index
        %33 = vector.load %arg9[%c0_23, %c0_24] : memref<8x1xf32, #tpu.memory_space<vmem>>, vector<8x1xf32>
        tpu.vector_store %arg9[%c0_23, %c0_24], %32 {strides = array<i32>} : memref<8x1xf32, #tpu.memory_space<vmem>>, vector<8x1xf32>,
        %cst_25 = arith.constant 0.000000e+00 : f32
        %34 = vector.broadcast %cst_25 : f32 to vector<8x1xf32>
        %c0_26 = arith.constant 0 : index
        %c0_27 = arith.constant 0 : index
        %35 = vector.load %arg10[%c0_26, %c0_27] : memref<8x1xf32, #tpu.memory_space<vmem>>, vector<8x1xf32>
        tpu.vector_store %arg10[%c0_26, %c0_27], %34 {strides = array<i32>} : memref<8x1xf32, #tpu.memory_space<vmem>>, vector<8x1xf32>,
      } else {
      }
      %c0 = arith.constant 0 : index
      %c0_6 = arith.constant 0 : index
      %13 = vector.load %arg4[%c0, %c0_6] : memref<8x36xbf16, #tpu.memory_space<vmem>>, vector<8x36xbf16>
      %c0_7 = arith.constant 0 : index
      %c0_8 = arith.constant 0 : index
      %c0_9 = arith.constant 0 : index
      %14 = vector.load %arg3[%c0_7, %c0_8, %c0_9] : memref<1x36x256xbf16, #tpu.memory_space<vmem>>, vector<1x36x256xbf16>
      %15 = vector.shape_cast %14 : vector<1x36x256xbf16> to vector<36x256xbf16>
      %cst = arith.constant dense<0.000000e+00> : vector<8x256xf32>
      %16 = tpu.matmul %13, %15, %cst {dimension_numbers = #tpu.dot_dimension_numbers<[1], [0], [0], [1], [0, 0, 1, 1], [], []>} : vector<8x36xbf16>, vector<36x256xbf16>, vector<8x256xf32> -> vector<8x256xf32>
      %17 = arith.index_cast %1 : i32 to index
      %c0_10 = arith.constant 0 : index
      %c0_11 = arith.constant 0 : index
      %18 = vector.load %arg8[%17, %c0_10, %c0_11] : memref<2x8x256xf32, #tpu.memory_space<vmem>>, vector<1x8x256xf32>
      %19 = vector.shape_cast %18 : vector<1x8x256xf32> to vector<8x256xf32>
      %20 = vector.shape_cast %16 : vector<8x256xf32> to vector<1x8x256xf32>
      tpu.vector_store %arg8[%17, %c0_10, %c0_11], %20 {strides = array<i32>} : memref<2x8x256xf32, #tpu.memory_space<vmem>>, vector<1x8x256xf32>,
      %c0_12 = arith.constant 0 : index
      %c0_13 = arith.constant 0 : index
      %21 = vector.load %arg9[%c0_12, %c0_13] : memref<8x1xf32, #tpu.memory_space<vmem>>, vector<8x1xf32>
      %cst_14 = arith.constant dense<0.000000e+00> : vector<8xf32>
      %22 = vector.multi_reduction <add>, %16, %cst_14 [1] : vector<8x256xf32> to vector<8xf32>
      %23 = vector.shape_cast %22 : vector<8xf32> to vector<8x1xf32>
      %24 = arith.addf %21, %23 : vector<8x1xf32>
      %c0_15 = arith.constant 0 : index
      %c0_16 = arith.constant 0 : index
      %25 = vector.load %arg9[%c0_15, %c0_16] : memref<8x1xf32, #tpu.memory_space<vmem>>, vector<8x1xf32>
      tpu.vector_store %arg9[%c0_15, %c0_16], %24 {strides = array<i32>} : memref<8x1xf32, #tpu.memory_space<vmem>>, vector<8x1xf32>,
      %c0_17 = arith.constant 0 : index
      %c0_18 = arith.constant 0 : index
      %26 = vector.load %arg10[%c0_17, %c0_18] : memref<8x1xf32, #tpu.memory_space<vmem>>, vector<8x1xf32>
      %27 = arith.mulf %16, %16 : vector<8x256xf32>
      %cst_19 = arith.constant dense<0.000000e+00> : vector<8xf32>
      %28 = vector.multi_reduction <add>, %27, %cst_19 [1] : vector<8x256xf32> to vector<8xf32>
      %29 = vector.shape_cast %28 : vector<8xf32> to vector<8x1xf32>
      %30 = arith.addf %26, %29 : vector<8x1xf32>
      %c0_20 = arith.constant 0 : index
      %c0_21 = arith.constant 0 : index
      %31 = vector.load %arg10[%c0_20, %c0_21] : memref<8x1xf32, #tpu.memory_space<vmem>>, vector<8x1xf32>
      tpu.vector_store %arg10[%c0_20, %c0_21], %30 {strides = array<i32>} : memref<8x1xf32, #tpu.memory_space<vmem>>, vector<8x1xf32>,
    } else {
    }
    %c1_i32_3 = arith.constant 1 : i32
    %8 = arith.cmpi eq, %arg0, %c1_i32_3 : i32
    %9 = arith.extui %8 : i1 to i32
    %c0_i32_4 = arith.constant 0 : i32
    %10 = arith.cmpi ne, %9, %c0_i32_4 : i32
    scf.if %10 {
      %11 = arith.extui %4 : i1 to i32
      %c0_i32_5 = arith.constant 0 : i32
      %12 = arith.cmpi ne, %11, %c0_i32_5 : i32
      scf.if %12 {
        %c0_14 = arith.constant 0 : index
        %c0_15 = arith.constant 0 : index
        %27 = vector.load %arg9[%c0_14, %c0_15] : memref<8x1xf32, #tpu.memory_space<vmem>>, vector<8x1xf32>
        %cst_16 = arith.constant 5.120000e+02 : f32
        %28 = vector.broadcast %cst_16 : f32 to vector<8x1xf32>
        %29 = arith.divf %27, %28 : vector<8x1xf32>
        %c0_17 = arith.constant 0 : index
        %c0_18 = arith.constant 0 : index
        %30 = vector.load %arg10[%c0_17, %c0_18] : memref<8x1xf32, #tpu.memory_space<vmem>>, vector<8x1xf32>
        %cst_19 = arith.constant 5.120000e+02 : f32
        %31 = vector.broadcast %cst_19 : f32 to vector<8x1xf32>
        %32 = arith.divf %30, %31 : vector<8x1xf32>
        %33 = arith.mulf %29, %29 : vector<8x1xf32>
        %34 = arith.subf %32, %33 : vector<8x1xf32>
        %cst_20 = arith.constant 0.000000e+00 : f32
        %35 = vector.broadcast %cst_20 : f32 to vector<8x1xf32>
        %36 = arith.maximumf %34, %35 : vector<8x1xf32>
        %c0_21 = arith.constant 0 : index
        %c0_22 = arith.constant 0 : index
        %37 = vector.load %arg5[%c0_21, %c0_22] : memref<8x1xf32, #tpu.memory_space<vmem>>, vector<8x1xf32>
        %cst_23 = arith.constant 9.99999974E-6 : f32
        %38 = vector.broadcast %cst_23 : f32 to vector<8x1xf32>
        %39 = arith.addf %36, %38 : vector<8x1xf32>
        %40 = math.rsqrt %39 : vector<8x1xf32>
        %41 = arith.mulf %37, %40 : vector<8x1xf32>
        %c0_24 = arith.constant 0 : index
        %c0_25 = arith.constant 0 : index
        %42 = vector.load %arg11[%c0_24, %c0_25] : memref<8x1xf32, #tpu.memory_space<vmem>>, vector<8x1xf32>
        tpu.vector_store %arg11[%c0_24, %c0_25], %41 {strides = array<i32>} : memref<8x1xf32, #tpu.memory_space<vmem>>, vector<8x1xf32>,
        %c0_26 = arith.constant 0 : index
        %c0_27 = arith.constant 0 : index
        %43 = vector.load %arg6[%c0_26, %c0_27] : memref<8x1xf32, #tpu.memory_space<vmem>>, vector<8x1xf32>
        %44 = arith.mulf %29, %41 : vector<8x1xf32>
        %45 = arith.subf %43, %44 : vector<8x1xf32>
        %c0_28 = arith.constant 0 : index
        %c0_29 = arith.constant 0 : index
        %46 = vector.load %arg12[%c0_28, %c0_29] : memref<8x1xf32, #tpu.memory_space<vmem>>, vector<8x1xf32>
        tpu.vector_store %arg12[%c0_28, %c0_29], %45 {strides = array<i32>} : memref<8x1xf32, #tpu.memory_space<vmem>>, vector<8x1xf32>,
      } else {
      }
      %13 = arith.index_cast %1 : i32 to index
      %c0 = arith.constant 0 : index
      %c0_6 = arith.constant 0 : index
      %14 = vector.load %arg8[%13, %c0, %c0_6] : memref<2x8x256xf32, #tpu.memory_space<vmem>>, vector<1x8x256xf32>
      %15 = vector.shape_cast %14 : vector<1x8x256xf32> to vector<8x256xf32>
      %c0_7 = arith.constant 0 : index
      %c0_8 = arith.constant 0 : index
      %16 = vector.load %arg11[%c0_7, %c0_8] : memref<8x1xf32, #tpu.memory_space<vmem>>, vector<8x1xf32>
      %17 = vector.broadcast %16 : vector<8x1xf32> to vector<8x256xf32>
      %18 = arith.mulf %15, %17 : vector<8x256xf32>
      %c0_9 = arith.constant 0 : index
      %c0_10 = arith.constant 0 : index
      %19 = vector.load %arg12[%c0_9, %c0_10] : memref<8x1xf32, #tpu.memory_space<vmem>>, vector<8x1xf32>
      %20 = vector.broadcast %19 : vector<8x1xf32> to vector<8x256xf32>
      %21 = arith.addf %18, %20 : vector<8x256xf32>
      %cst = arith.constant 0.000000e+00 : f32
      %22 = vector.broadcast %cst : f32 to vector<8x256xf32>
      %23 = arith.maximumf %21, %22 : vector<8x256xf32>
      %c0_11 = arith.constant 0 : index
      %c0_12 = arith.constant 0 : index
      %c0_13 = arith.constant 0 : index
      %24 = vector.load %arg7[%c0_11, %c0_12, %c0_13] : memref<1x8x256xf32, #tpu.memory_space<vmem>>, vector<1x8x256xf32>
      %25 = vector.shape_cast %24 : vector<1x8x256xf32> to vector<8x256xf32>
      %26 = vector.shape_cast %23 : vector<8x256xf32> to vector<1x8x256xf32>
      tpu.vector_store %arg7[%c0_11, %c0_12, %c0_13], %26 {strides = array<i32>} : memref<1x8x256xf32, #tpu.memory_space<vmem>>, vector<1x8x256xf32>,
    } else {
    }
    return
  }
  func.func @transform_0(%arg0: i32, %arg1: i32, %arg2: i32) -> (i32, i32, i32) {
    %c1_i32 = arith.constant 1 : i32
    %0 = arith.subi %c1_i32, %arg0 : i32
    %1 = arith.muli %arg1, %0 : i32
    %c1_i32_0 = arith.constant 1 : i32
    %2 = arith.subi %c1_i32_0, %arg0 : i32
    %3 = arith.muli %arg2, %2 : i32
    %c0_i32 = arith.constant 0 : i32
    %c0_i32_1 = arith.constant 0 : i32
    return %1, %c0_i32, %3 : i32, i32, i32
  }
  func.func @transform_1(%arg0: i32, %arg1: i32, %arg2: i32) -> (i32, i32) {
    %c0_i32 = arith.constant 0 : i32
    %c0_i32_0 = arith.constant 0 : i32
    %c0_i32_1 = arith.constant 0 : i32
    return %c0_i32, %c0_i32_0 : i32, i32
  }
  func.func @transform_2(%arg0: i32, %arg1: i32, %arg2: i32) -> (i32, i32) {
    %c0_i32 = arith.constant 0 : i32
    %c0_i32_0 = arith.constant 0 : i32
    %c0_i32_1 = arith.constant 0 : i32
    return %c0_i32, %c0_i32_0 : i32, i32
  }
  func.func @transform_3(%arg0: i32, %arg1: i32, %arg2: i32) -> (i32, i32) {
    %c0_i32 = arith.constant 0 : i32
    %c0_i32_0 = arith.constant 0 : i32
    %c0_i32_1 = arith.constant 0 : i32
    return %c0_i32, %c0_i32_0 : i32, i32
  }
  func.func @transform_4(%arg0: i32, %arg1: i32, %arg2: i32) -> (i32, i32, i32) {
    %0 = arith.muli %arg1, %arg0 : i32
    %1 = arith.muli %arg2, %arg0 : i32
    %c0_i32 = arith.constant 0 : i32
    %c0_i32_0 = arith.constant 0 : i32
    return %0, %c0_i32, %1 : i32, i32, i32
  }
}

</mosaic_0001>

<llo_original>
// kernel: conv_bn_relu.1
$region0: #{conv_bn_relu.1}
  #allocation0 [shape = 'u32[]', space=smem, size = 0x4, offset = 0x4, fixed_abs, tag = 'smem constant byte address 0x4 - core index']
  #allocation1 [shape = 'u32[72,128]{1,0:T(1,128)}', space=vmem, size = 0x9000, scoped, tag = 'internal scratch']
  #allocation2 [shape = 'f32[2,8,256]{2,1,0:T(8,128)}', space=vmem, size = 0x4000, scoped, tag = 'scratch operand']
  #allocation3 [shape = 'f32[8,1]{1,0:T(8,128)}', space=vmem, size = 0x1000, scoped, tag = 'scratch operand']
  #allocation4 [shape = 'f32[8,1]{1,0:T(8,128)}', space=vmem, size = 0x1000, scoped, tag = 'scratch operand']
  #allocation5 [shape = 'f32[8,1]{1,0:T(8,128)}', space=vmem, size = 0x1000, scoped, tag = 'scratch operand']
  #allocation6 [shape = 'f32[8,1]{1,0:T(8,128)}', space=vmem, size = 0x1000, scoped, tag = 'scratch operand']
  %s0 = inlined_call_operand.vmem [shape: bf16[2,36,256], index: 0, kind: input, shape index: {}]
  %s1 = inlined_call_operand.vmem [shape: bf16[8,36], index: 1, kind: input, shape index: {}]
  %s2 = inlined_call_operand.vmem [shape: f32[8,1], index: 2, kind: input, shape index: {}]
  %s3 = inlined_call_operand.vmem [shape: f32[8,1], index: 3, kind: input, shape index: {}]
  %s4 = inlined_call_operand.vmem [shape: f32[2,8,256], index: 4, kind: output, shape index: {}]
  %s5 = sld [smem:[#allocation0]]
  $region65: #{conv_bn_relu.1} parent=0
    _
  %s7 = ssub.s32 1, %s5
  %s8 = scalar_select 0, %s7, %s5
  loop: start=0, step=1, limit=6
  $region2: #{conv_bn_relu.1} parent=0 // loop_pre_header
    _
  $region3: #{conv_bn_relu.1} parent=0 // loop_header
    %s10 = sphi 0, %s14
    %p11 = scmp.ge.s32.totalorder %s10, 6
    %s17 = sphi 0, %s36
    %s18 = sphi 0, %s32
    %s19 = sphi 0, %s28
    %s20 = sphi 0, %s17
    %s21 = sphi 0, %s18
    %s22 = sphi 0, %s19
    %s23 = sphi 0, %s20
    %s24 = sphi 0, %s21
    %s25 = sphi 0, %s22
    %s47 = sphi 0, %s49
    %s50 = sphi 0, %s47
    %s51 = sphi 0, %s50
    %s67 = sphi 0, %s51
    %s71 = sphi 0, %s71
    %s73 = sphi 0, %s71
    %s74 = sphi 0, %s73
    %s88 = sphi 0, %s74
    %s92 = sphi 0, %s92
    %s94 = sphi 0, %s92
    %s95 = sphi 0, %s94
    %s109 = sphi 0, %s95
    %s113 = sphi 0, %s113
    %s115 = sphi 0, %s113
    %s116 = sphi 0, %s115
    %s130 = sphi 0, %s116
    %s142 = sphi 0, %s144
    %s145 = sphi 0, %s142
    %s146 = sphi 0, %s145
    %s162 = sphi 0, %s146
  $region4: #{conv_bn_relu.1} parent=0 // loop_header_branch
    %13 = sbr.rel (%p11) target = $region8
  $region5: #{conv_bn_relu.1} parent=0 // loop_body
    %s15 = ssub.s32 %s10, 1
    %s16 = ssub.s32 %s10, 2
    %s26 = sadd.s32 1, %s19
    %p27 = scmp.ge.s32.totalorder %s26, 1
    %s28 = scalar_select %p27, 0, %s26
    %s29 = sadd.s32 1, %s18
    %s30 = scalar_select %p27, %s29, %s18
    %p31 = scmp.ge.s32.totalorder %s30, 2
    %s32 = scalar_select %p31, 0, %s30
    %s33 = sadd.s32 1, %s17
    %s34 = scalar_select %p31, %s33, %s17
    %p35 = scmp.ge.s32.totalorder %s34, 2
    %s36 = scalar_select %p35, 0, %s34
    %s37 = ssub.s32 1, %s17
    %s38 = smul.u32 %s18, %s37
    %s39 = smul.u32 %s19, %s37
    %s40 = ssub.s32 1, %s36
    %s41 = smul.u32 %s32, %s40
    %s42 = smul.u32 %s28, %s40
    %s43 = ssub.s32 %s38, %s41
    %s44 = ssub.s32 %s39, %s42
    %s45 = sor.u32 %s43, %s44
    %p46 = scmp.eq.s32.totalorder %s45, 0
    %s48 = sadd.s32 %s47, 1
    %s49 = scalar_select %p46, %s47, %s48
    %p52 = pneg %p46
    %p53 = scmp.eq.s32.totalorder %s10, 3
    %p54 = por %p52, %p53
    %p55 = scmp.ne.s32.totalorder %s47, %s50
    %p56 = scmp.eq.s32.totalorder %s10, 0
    %p57 = por %p55, %p56
    %p58 = scmp.ne.s32.totalorder %s47, %s50
    %p59 = scmp.eq.s32.totalorder %s15, 3
    %p60 = por %p58, %p59
    %p61 = scmp.ne.s32.totalorder %s50, %s51
    %p62 = scmp.eq.s32.totalorder %s15, 0
    %p63 = por %p61, %p62
    %p64 = scmp.ne.s32.totalorder %s50, %s51
    %p65 = scmp.eq.s32.totalorder %s16, 3
    %p66 = por %p64, %p65
    %p68 = scmp.ne.s32.totalorder %s51, %s67
    %p69 = scmp.eq.s32.totalorder %s16, 0
    %p70 = por %p68, %p69
    %s72 = sadd.s32 %s71, 1
    %p75 = scmp.eq.s32.totalorder %s10, 3
    %p76 = scmp.ne.s32.totalorder %s71, %s73
    %p77 = scmp.eq.s32.totalorder %s10, 0
    %p78 = por %p76, %p77
    %p79 = scmp.ne.s32.totalorder %s71, %s73
    %p80 = scmp.eq.s32.totalorder %s15, 3
    %p81 = por %p79, %p80
    %p82 = scmp.ne.s32.totalorder %s73, %s74
    %p83 = scmp.eq.s32.totalorder %s15, 0
    %p84 = por %p82, %p83
    %p85 = scmp.ne.s32.totalorder %s73, %s74
    %p86 = scmp.eq.s32.totalorder %s16, 3
    %p87 = por %p85, %p86
    %p89 = scmp.ne.s32.totalorder %s74, %s88
    %p90 = scmp.eq.s32.totalorder %s16, 0
    %p91 = por %p89, %p90
    %s93 = sadd.s32 %s92, 1
    %p96 = scmp.eq.s32.totalorder %s10, 3
    %p97 = scmp.ne.s32.totalorder %s92, %s94
    %p98 = scmp.eq.s32.totalorder %s10, 0
    %p99 = por %p97, %p98
    %p100 = scmp.ne.s32.totalorder %s92, %s94
    %p101 = scmp.eq.s32.totalorder %s15, 3
    %p102 = por %p100, %p101
    %p103 = scmp.ne.s32.totalorder %s94, %s95
    %p104 = scmp.eq.s32.totalorder %s15, 0
    %p105 = por %p103, %p104
    %p106 = scmp.ne.s32.totalorder %s94, %s95
    %p107 = scmp.eq.s32.totalorder %s16, 3
    %p108 = por %p106, %p107
    %p110 = scmp.ne.s32.totalorder %s95, %s109
    %p111 = scmp.eq.s32.totalorder %s16, 0
    %p112 = por %p110, %p111
    %s114 = sadd.s32 %s113, 1
    %p117 = scmp.eq.s32.totalorder %s10, 3
    %p118 = scmp.ne.s32.totalorder %s113, %s115
    %p119 = scmp.eq.s32.totalorder %s10, 0
    %p120 = por %p118, %p119
    %p121 = scmp.ne.s32.totalorder %s113, %s115
    %p122 = scmp.eq.s32.totalorder %s15, 3
    %p123 = por %p121, %p122
    %p124 = scmp.ne.s32.totalorder %s115, %s116
    %p125 = scmp.eq.s32.totalorder %s15, 0
    %p126 = por %p124, %p125
    %p127 = scmp.ne.s32.totalorder %s115, %s116
    %p128 = scmp.eq.s32.totalorder %s16, 3
    %p129 = por %p127, %p128
    %p131 = scmp.ne.s32.totalorder %s116, %s130
    %p132 = scmp.eq.s32.totalorder %s16, 0
    %p133 = por %p131, %p132
    %s134 = smul.u32 %s18, %s17
    %s135 = smul.u32 %s19, %s17
    %s136 = smul.u32 %s32, %s36
    %s137 = smul.u32 %s28, %s36
    %s138 = ssub.s32 %s134, %s136
    %s139 = ssub.s32 %s135, %s137
    %s140 = sor.u32 %s138, %s139
    %p141 = scmp.eq.s32.totalorder %s140, 0
    %s143 = sadd.s32 %s142, 1
    %s144 = scalar_select %p141, %s142, %s143
    %p147 = pneg %p141
    %p148 = scmp.eq.s32.totalorder %s10, 3
    %p149 = por %p147, %p148
    %p150 = scmp.ne.s32.totalorder %s142, %s145
    %p151 = scmp.eq.s32.totalorder %s10, 0
    %p152 = por %p150, %p151
    %p153 = scmp.ne.s32.totalorder %s142, %s145
    %p154 = scmp.eq.s32.totalorder %s15, 3
    %p155 = por %p153, %p154
    %p156 = scmp.ne.s32.totalorder %s145, %s146
    %p157 = scmp.eq.s32.totalorder %s15, 0
    %p158 = por %p156, %p157
    %p159 = scmp.ne.s32.totalorder %s145, %s146
    %p160 = scmp.eq.s32.totalorder %s16, 3
    %p161 = por %p159, %p160
    %p163 = scmp.ne.s32.totalorder %s146, %s162
    %p164 = scmp.eq.s32.totalorder %s16, 0
    %p165 = por %p163, %p164
    %p166 = scmp.le.s32.totalorder 1, %s10
    %p167 = scmp.lt.s32.totalorder %s10, 5
    %p168 = pnand %p166, %p167
    %p169 = pneg %p168
    // Predicated region
    $region9: #{conv_bn_relu.1} parent=5 // pred_check
      _
    $region10: #{conv_bn_relu.1} parent=5 // pred_check_branch
      %171 = sbr.rel (%p168) target = $region12
    $region11: #{conv_bn_relu.1} parent=5 // pred_region
      %s172 = ssub.s32 %s10, 1
      // Predicated region
      $region13: #{conv_bn_relu.1} parent=11 // pred_check
        %p173 = pneg %p84
      $region14: #{conv_bn_relu.1} parent=11 // pred_check_branch
        %175 = sbr.rel (%p173) target = $region16
      $region15: #{conv_bn_relu.1} parent=11 // pred_region
        _
      $region16: #{conv_bn_relu.1} parent=11 // pred_fallthru
        _
      // Predicated region
      $region17: #{conv_bn_relu.1} parent=11 // pred_check
        %p176 = pneg %p105
      $region18: #{conv_bn_relu.1} parent=11 // pred_check_branch
        %178 = sbr.rel (%p176) target = $region20
      $region19: #{conv_bn_relu.1} parent=11 // pred_region
        _
      $region20: #{conv_bn_relu.1} parent=11 // pred_fallthru
        _
      // Predicated region
      $region21: #{conv_bn_relu.1} parent=11 // pred_check
        %p179 = pneg %p126
      $region22: #{conv_bn_relu.1} parent=11 // pred_check_branch
        %181 = sbr.rel (%p179) target = $region24
      $region23: #{conv_bn_relu.1} parent=11 // pred_region
        _
      $region24: #{conv_bn_relu.1} parent=11 // pred_fallthru
        _
    $region12: #{conv_bn_relu.1} parent=5 // pred_fallthru
      _
    %p182 = scmp.lt.s32.totalorder %s10, 4
    // Predicated region
    $region25: #{conv_bn_relu.1} parent=5 // pred_check
      %p183 = pneg %p182
    $region26: #{conv_bn_relu.1} parent=5 // pred_check_branch
      %185 = sbr.rel (%p183) target = $region28
    $region27: #{conv_bn_relu.1} parent=5 // pred_region
      // Predicated region
      $region29: #{conv_bn_relu.1} parent=27 // pred_check
        %p186 = pneg %p57
      $region30: #{conv_bn_relu.1} parent=27 // pred_check_branch
        %188 = sbr.rel (%p186) target = $region32
      $region31: #{conv_bn_relu.1} parent=27 // pred_region
        %s189 = ssub.s32 1, %s17
        %s190 = smul.u32 %s18, %s189
        %s191 = smul.u32 %s19, %s189
        %s192 = smul.u32 2, %s191
        %p193 = scmp.lt.s32.totalorder %s190, 1
        %s194 = scalar_select %p193, %s190, 1
        %p195 = scmp.lt.s32.totalorder %s192, 1
        %s196 = scalar_select %p195, %s192, 1
        %s197 = smul.addr %s194, 10
        %s198 = sadd.s32 %s196, %s197
        %s199 = smul.addr %s198, 4
        %s200 = scalar_lea.vmem %s0, %s199
        %s201 = ssub.s32 1, %s17
        %s202 = smul.u32 %s18, %s201
        %s203 = smul.u32 %s19, %s201
        %s204 = smul.u32 2, %s203
      $region32: #{conv_bn_relu.1} parent=27 // pred_fallthru
        _
    $region28: #{conv_bn_relu.1} parent=5 // pred_fallthru
      _
    %p205 = scmp.le.s32.totalorder 1, %s10
    %p206 = scmp.lt.s32.totalorder %s10, 5
    %p207 = pnand %p205, %p206
    %p208 = pneg %p207
    // Predicated region
    $region33: #{conv_bn_relu.1} parent=5 // pred_check
      _
    $region34: #{conv_bn_relu.1} parent=5 // pred_check_branch
      %210 = sbr.rel (%p207) target = $region36
    $region35: #{conv_bn_relu.1} parent=5 // pred_region
      %s211 = ssub.s32 %s10, 1
      %s212 = ssub.s32 1, %s20
      %s213 = smul.u32 %s21, %s212
      %s214 = smul.u32 %s22, %s212
      %s215 = smul.u32 2, %s214
      %p216 = scmp.lt.s32.totalorder %s213, 1
      %s217 = scalar_select %p216, %s213, 1
      %p218 = scmp.lt.s32.totalorder %s215, 1
      %s219 = scalar_select %p218, %s215, 1
      %s220 = smul.addr %s217, 10
      %s221 = sadd.s32 %s219, %s220
      %s222 = smul.addr %s221, 4
      %s223 = scalar_lea.vmem %s0, %s222
      %p224 = pneg %p63
      %p225 = pneg %p60
      %p226 = pneg %p84
      %p227 = pneg %p81
      %p228 = pneg %p105
      %p229 = pneg %p102
      %p230 = pneg %p126
      %p231 = pneg %p123
      %p232 = pneg %p158
      %p233 = pneg %p155
      %s234 = smul.u32 %s21, %s20
      %s235 = smul.u32 %s22, %s20
      %s236 = smul.u32 2, %s235
      %p237 = scmp.lt.s32.totalorder %s234, 1
      %s238 = scalar_select %p237, %s234, 1
      %p239 = scmp.lt.s32.totalorder %s236, 1
      %s240 = scalar_select %p239, %s236, 1
      %s241 = smul.addr %s238, 2
      %s242 = sadd.s32 %s240, %s241
      %s243 = smul.addr %s242, 8
      %s244 = scalar_lea.vmem %s4, %s243
      %s245 = ssub.s32 1, %s20
      %s246 = smul.u32 %s21, %s245
      %s247 = smul.u32 %s22, %s245
      %s248 = smul.u32 2, %s247
      %p249 = scmp.lt.s32.totalorder %s246, 1
      %s250 = scalar_select %p249, %s246, 1
      %p251 = scmp.lt.s32.totalorder %s248, 1
      %s252 = scalar_select %p251, %s248, 1
      %s253 = smul.addr %s250, 10
      %s254 = sadd.s32 %s252, %s253
      %s255 = smul.addr %s254, 4
      %s256 = scalar_lea.vmem %s0, %s255
      %s257 = ssub.s32 1, %s20
      %s258 = smul.u32 %s21, %s257
      %s259 = smul.u32 %s22, %s257
      %s260 = smul.u32 2, %s259
      %s261 = smul.u32 %s21, %s20
      %s262 = smul.u32 %s22, %s20
      %s263 = smul.u32 2, %s262
      %p264 = scmp.lt.s32.totalorder %s261, 1
      %s265 = scalar_select %p264, %s261, 1
      %p266 = scmp.lt.s32.totalorder %s263, 1
      %s267 = scalar_select %p266, %s263, 1
      %s268 = smul.addr %s265, 2
      %s269 = sadd.s32 %s267, %s268
      %s270 = smul.addr %s269, 8
      %s271 = scalar_lea.vmem %s4, %s270
      %s272 = smul.u32 %s21, %s20
      %s273 = smul.u32 %s22, %s20
      %s274 = smul.u32 2, %s273
      %s276 = sadd.s32 %s21, %s22
      %p277 = scmp.eq.s32.totalorder %s21, 0
      %p278 = scmp.eq.s32.totalorder %s22, 0
      %p279 = pnand %p277, %p278
      %p280 = pneg %p279
      %p281 = scmp.eq.s32.totalorder %s20, 0
      // Predicated region
      $region37: #{conv_bn_relu.1} parent=35 // pred_check
        %p282 = pneg %p281
      $region38: #{conv_bn_relu.1} parent=35 // pred_check_branch
        %284 = sbr.rel (%p282) target = $region40
      $region39: #{conv_bn_relu.1} parent=35 // pred_region
        // Predicated region
        $region41: #{conv_bn_relu.1} parent=39 // pred_check
          _
        $region42: #{conv_bn_relu.1} parent=39 // pred_check_branch
          %286 = sbr.rel (%p279) target = $region44
        $region43: #{conv_bn_relu.1} parent=39 // pred_region
          %vm287 = vcmask 7168
          %288 = vst.msk [vmem:[#allocation3] sm:$0xff] %vm287, 0.0
          %289 = vst.msk [vmem:[#allocation4] sm:$0xff] %vm287, 0.0
        $region44: #{conv_bn_relu.1} parent=39 // pred_fallthru
          _
        %v290 = vld [vmem:[%s1] sm:$0xf]
        %v291 = vld [vmem:[%s256] sm:$0xff]
        %v292 = vld [vmem:[%s256 + $0x8] sm:$0xff]
        %v293 = vld [vmem:[%s256 + $0x10] sm:$0xff]
        %v294 = vld [vmem:[%s256 + $0x18] sm:$0xff]
        %v295 = vld [vmem:[%s256 + $0x20] sm:$0x33]
        %v301 = vunpack.c.l.b16 %v291
        %v302 = vunpack.c.h.b16 %v291
        %v303 = vunpack.c.l.b16 %v292
        %v304 = vunpack.c.h.b16 %v292
        %v305 = vunpack.c.l.b16 %v293
        %v306 = vunpack.c.h.b16 %v293
        %v307 = vunpack.c.l.b16 %v294
        %v308 = vunpack.c.h.b16 %v294
        %v309 = vunpack.c.l.b16 %v295
        %v310 = vunpack.c.h.b16 %v295
        %v311 = vpack.c.b16 %v303, %v301
        %v312 = vpack.c.b16 %v304, %v302
        %v313 = vpack.c.b16 %v307, %v305
        %v314 = vpack.c.b16 %v308, %v306
        %v315 = vpack.c.b16 %v309, %v309
        %v316 = vpack.c.b16 %v310, %v310
        %vm321 = vcmask 293888
        %v323 = vsel %vm321, %v290, 0
        %vm325 = vcmask 1041408
        %v327 = vsel %vm325, %v315, 0
        %v330 = vsel %vm325, %v316, 0
        %332 = vmatpush.bf16.msra.mxu0 0
        %333 = vmatpush.bf16.msra.mxu0 0
        %334 = vmatpush.bf16.msra.mxu0 0
        %335 = vmatpush.bf16.msra.mxu0 0
        %336 = vmatpush.bf16.msra.mxu0 0
        %337 = vmatpush.bf16.msra.mxu0 %v327
        %338 = vmatpush.bf16.msra.mxu0 %v313
        %339 = vmatpush.bf16.msra.mxu0 %v311
        %340 = vmatmul.bf16.gmra.mxu0 %v323
        %v341 = vpop.f32.mrf.mxu0
        %v342 = vadd.f32 0.0, %v341
        %v343 = vpop.f32.mrf.mxu0
        %344 = vdwg.mxu0
        %345 = vmatpush.bf16.msra.mxu0 0
        %346 = vmatpush.bf16.msra.mxu0 0
        %347 = vmatpush.bf16.msra.mxu0 0
        %348 = vmatpush.bf16.msra.mxu0 0
        %349 = vmatpush.bf16.msra.mxu0 0
        %350 = vmatpush.bf16.msra.mxu0 %v330
        %351 = vmatpush.bf16.msra.mxu0 %v314
        %352 = vmatpush.bf16.msra.mxu0 %v312
        %353 = vmatmul.bf16.gmra.mxu0 %v323
        %v354 = vpop.f32.mrf.mxu0
        %v355 = vadd.f32 0.0, %v354
        %v356 = vpop.f32.mrf.mxu0
        %357 = vdwg.mxu0
        %s358 = smul.u32 %s276, 2
        %s359 = smul.addr %s358, 8
        %s360 = scalar_lea.vmem [#allocation2], %s359
        %361 = vst [vmem:[%s360] sm:$0xff] %v342
        %362 = vst [vmem:[%s360 + $0x8] sm:$0xff] %v355
        %v363 = vld [vmem:[#allocation3] sm:$0xff]
        %v364 = vadd.f32 %v342, %v355
        %365 = vadd.xlane.f32.xlu0 %v364
        %v366 = vpop.xlane.xlu0 %365
        %v367 = vadd.f32 %v363, %v366
        %vm368 = vcmask 7168
        %369 = vst.msk [vmem:[#allocation3] sm:$0xff] %vm368, %v367
        %v370 = vld [vmem:[#allocation4] sm:$0xff]
        %v371 = vmul.f32 %v342, %v342
        %v372 = vmul.f32 %v355, %v355
        %v373 = vadd.f32 %v371, %v372
        %374 = vadd.xlane.f32.xlu0 %v373
        %v375 = vpop.xlane.xlu0 %374
        %v376 = vadd.f32 %v370, %v375
        %377 = vst.msk [vmem:[#allocation4] sm:$0xff] %vm368, %v376
      $region40: #{conv_bn_relu.1} parent=35 // pred_fallthru
        _
      %p378 = scmp.eq.s32.totalorder %s20, 1
      // Predicated region
      $region45: #{conv_bn_relu.1} parent=35 // pred_check
        %p379 = pneg %p378
      $region46: #{conv_bn_relu.1} parent=35 // pred_check_branch
        %381 = sbr.rel (%p379) target = $region48
      $region47: #{conv_bn_relu.1} parent=35 // pred_region
        // Predicated region
        $region49: #{conv_bn_relu.1} parent=47 // pred_check
          _
        $region50: #{conv_bn_relu.1} parent=47 // pred_check_branch
          %383 = sbr.rel (%p279) target = $region52
        $region51: #{conv_bn_relu.1} parent=47 // pred_region
          %v384 = vld [vmem:[#allocation3] sm:$0xff]
          %v385 = vrcp.pop 512.0
          %v386 = vmul.f32 512.0, %v385
          %v387 = vsub.f32 1.0, %v386
          %v388 = vmul.f32 %v385, %v387
          %v389 = vadd.f32 %v385, %v388
          %vm390 = vweird.f32 %v385
          %v391 = vsel %vm390, %v385, %v389
          %v392 = vmul.f32 %v384, %v391
          %v393 = vld [vmem:[#allocation4] sm:$0xff]
          %v394 = vmul.f32 %v393, %v391
          %v395 = vmul.f32 %v392, %v392
          %v396 = vsub.f32 %v394, %v395
          %v397 = vmax.f32 %v396, 0.0
          %v398 = vld [vmem:[%s2] sm:$0xff]
          %v399 = vadd.f32 %v397, 1e-05
          %v400 = vrsqrt.pop %v399
          %v401 = vmul.f32 %v400, %v399
          %v402 = vmul.f32 %v401, %v400
          %v403 = vmul.f32 0.5, %v402
          %v404 = vsub.f32 1.5, %v403
          %v405 = vmul.f32 %v400, %v404
          %vm406 = vweird.f32 %v399
          %vm407 = vweird.f32 %v400
          %vm408 = vmor %vm406, %vm407
          %v409 = vsel %vm408, %v400, %v405
          %v410 = vmul.f32 %v398, %v409
          %vm411 = vcmask 7168
          %412 = vst.msk [vmem:[#allocation5] sm:$0xff] %vm411, %v410
          %v413 = vld [vmem:[%s3] sm:$0xff]
          %v414 = vmul.f32 %v392, %v410
          %v415 = vsub.f32 %v413, %v414
          %416 = vst.msk [vmem:[#allocation6] sm:$0xff] %vm411, %v415
        $region52: #{conv_bn_relu.1} parent=47 // pred_fallthru
          _
        %s417 = smul.u32 %s276, 2
        %s418 = smul.addr %s417, 8
        %s419 = scalar_lea.vmem [#allocation2], %s418
        %v420 = vld [vmem:[%s419] sm:$0xff]
        %v421 = vld [vmem:[%s419 + $0x8] sm:$0xff]
        %v422 = vld [vmem:[#allocation5] sm:$0xff]
        %424 = vset.pattern.permute.xlu0 0
        %425 = vperm.xlu0 %424, %v422
        %v426 = vpop.permute.xlu0 %425
        %v428 = vmul.f32 %v420, %v426
        %v429 = vmul.f32 %v421, %v426
        %v430 = vld [vmem:[#allocation6] sm:$0xff]
        %432 = vset.pattern.permute.xlu0 0
        %433 = vperm.xlu0 %432, %v430
        %v434 = vpop.permute.xlu0 %433
        %v436 = vadd.f32 %v428, %v434
        %v437 = vadd.f32 %v429, %v434
        %v438 = vmax.f32 %v436, 0.0
        %v439 = vmax.f32 %v437, 0.0
        %440 = vst [vmem:[%s271] sm:$0xff] %v438
        %441 = vst [vmem:[%s271 + $0x8] sm:$0xff] %v439
      $region48: #{conv_bn_relu.1} parent=35 // pred_fallthru
        _
      %s442 = smul.u32 %s21, %s20
      %s443 = smul.u32 %s22, %s20
      %s444 = smul.u32 2, %s443
      %p445 = scmp.lt.s32.totalorder %s442, 1
      %s446 = scalar_select %p445, %s442, 1
      %p447 = scmp.lt.s32.totalorder %s444, 1
      %s448 = scalar_select %p447, %s444, 1
      %s449 = smul.addr %s446, 2
      %s450 = sadd.s32 %s448, %s449
      %s451 = smul.addr %s450, 8
      %s452 = scalar_lea.vmem %s4, %s451
      // Predicated region
      $region53: #{conv_bn_relu.1} parent=35 // pred_check
        %p453 = pneg %p155
      $region54: #{conv_bn_relu.1} parent=35 // pred_check_branch
        %455 = sbr.rel (%p453) target = $region56
      $region55: #{conv_bn_relu.1} parent=35 // pred_region
        %s456 = smul.u32 %s21, %s20
        %s457 = smul.u32 %s22, %s20
        %s458 = smul.u32 2, %s457
      $region56: #{conv_bn_relu.1} parent=35 // pred_fallthru
        _
    $region36: #{conv_bn_relu.1} parent=5 // pred_fallthru
      _
    %p459 = scmp.le.s32.totalorder 2, %s10
    // Predicated region
    $region57: #{conv_bn_relu.1} parent=5 // pred_check
      %p460 = pneg %p459
    $region58: #{conv_bn_relu.1} parent=5 // pred_check_branch
      %462 = sbr.rel (%p460) target = $region60
    $region59: #{conv_bn_relu.1} parent=5 // pred_region
      %s463 = ssub.s32 %s10, 2
      // Predicated region
      $region61: #{conv_bn_relu.1} parent=59 // pred_check
        %p464 = pneg %p161
      $region62: #{conv_bn_relu.1} parent=59 // pred_check_branch
        %466 = sbr.rel (%p464) target = $region64
      $region63: #{conv_bn_relu.1} parent=59 // pred_region
        %s467 = smul.u32 %s24, %s23
        %s468 = smul.u32 %s25, %s23
        %s469 = smul.u32 2, %s468
        %p470 = scmp.lt.s32.totalorder %s467, 1
        %s471 = scalar_select %p470, %s467, 1
        %p472 = scmp.lt.s32.totalorder %s469, 1
        %s473 = scalar_select %p472, %s469, 1
        %s474 = smul.addr %s471, 2
        %s475 = sadd.s32 %s473, %s474
        %s476 = smul.addr %s475, 8
        %s477 = scalar_lea.vmem %s4, %s476
      $region64: #{conv_bn_relu.1} parent=59 // pred_fallthru
        _
    $region60: #{conv_bn_relu.1} parent=5 // pred_fallthru
      _
  $region6: #{conv_bn_relu.1} parent=0 // loop_footer
    %s14 = sadd.s32 1, %s10
  $region7: #{conv_bn_relu.1} parent=0 // loop_footer_branch
    %9 = sbr.rel target = $region3
  $region8: #{conv_bn_relu.1} parent=0 // loop_exit
    _

</llo_original>
